<compile_context>
chip_gen: v5e
topology: v5e:2x2
jax: 0.10.0
libtpu: 0.0.40
codegen_flags: <defaults>
</compile_context>

<pallas_src>
import jax
import jax.numpy as jnp
import numpy as np
from jax import lax
from jax.experimental import pallas as pl
from jax.experimental.pallas import tpu as pltpu

EMBED_DIM = 10
HIDDEN_DIM = 10
VOCAB_SIZE = 26          # stand-in for len(caesercipher.vocab)  (alphabet)
SEQ_LEN = 8

GATE_PAD = 32            # gates i/f/g/o at lanes 0/32/64/96 -> one 128-lane vreg
V_PAD = 128              # lane-dense logits/probs width (sliced to VOCAB_SIZE outside)
V_ONEHOT = 32            # padded vocab rows for the one-hot embedding matmul

# Row layout of the packed parameter slab (every section is 128 lanes wide, f32).
R_EMB = 0                # embedding table (V, E)      at rows [0:26],  cols [0:10]
R_WIH = 32               # W_ih^T gate-padded (E, 128) at rows [32:42]
R_WHH = 48               # W_hh^T gate-padded (H, 128) at rows [48:58]
R_B = 64                 # (b_ih + b_hh) gate-padded   at row  64
R_WLIN = 72              # W_lin^T (H, 128)            at rows [72:82], cols [0:26]
R_BLIN = 88              # b_lin   (1, 128)            at row  88,      cols [0:26]
SLAB_ROWS = 96


# ---------------------------------------------------------------------------
# Pallas kernel: one batch tile (TB sequences x T steps).  Embedding via
# one-hot matmul, statically-unrolled LSTM recurrence with register-resident
# state, linear head and softmax-over-time, all inside the kernel.
# ---------------------------------------------------------------------------
def caeser_lstm_kernel(ids_ref, w_ref, out_ref):
    # ids_ref: (1, T*TB, 1) int32, time-major (row = t*TB + b_local)
    # w_ref:   (SLAB_ROWS, 128) float32 packed parameter slab
    # out_ref: (1, T*TB, V_PAD) float32 probabilities (softmax over time)
    TTB = ids_ref.shape[1]
    T = SEQ_LEN
    TB = TTB // T
    H = HIDDEN_DIM
    E = EMBED_DIM
    GP = GATE_PAD

    # ---- parameters: single packed VMEM slab, static sublane-aligned views --
    emb_tab = w_ref[R_EMB:R_EMB + V_ONEHOT, :E]        # (32, E)   rows >= V are 0
    wih_t = w_ref[R_WIH:R_WIH + E, :]                  # (E, 128)  gate-padded
    whh_t = w_ref[R_WHH:R_WHH + H, :]                  # (H, 128)  gate-padded
    b_gates = w_ref[R_B:R_B + 1, :]                    # (1, 128)  b_ih + b_hh
    wlin_t = w_ref[R_WLIN:R_WLIN + H, :]               # (H, 128)  lane-padded
    b_lin = w_ref[R_BLIN:R_BLIN + 1, :]                # (1, 128)

    # ---- embedding: gather-free one-hot @ table (MXU friendly) -------------
    ids = ids_ref[0]                                   # (T*TB, 1) int32
    iota = lax.broadcasted_iota(jnp.int32, (TTB, V_ONEHOT), 1)
    onehot = (iota == ids).astype(jnp.float32)         # (T*TB, 32)
    emb = jnp.dot(onehot, emb_tab,
                  preferred_element_type=jnp.float32)  # (T*TB, E)

    # ---- x_t @ W_ih^T + (b_ih + b_hh) for ALL timesteps at once ------------
    xp = jnp.dot(emb, wih_t,
                 preferred_element_type=jnp.float32) + b_gates   # (T*TB, 128)

    # ---- LSTM recurrence (PyTorch gate order i, f, g, o) -------------------
    # State stays in vregs; the T=8 loop is statically unrolled.
    h = jnp.zeros((TB, H), jnp.float32)
    c = jnp.zeros((TB, H), jnp.float32)
    hs_rows = []
    for t in range(T):
        gates = xp[t * TB:(t + 1) * TB, :] + jnp.dot(
            h, whh_t, preferred_element_type=jnp.float32)        # (TB, 128)
        sg = jax.nn.sigmoid(gates)     # one EUP pass over all four gates
        tg = jnp.tanh(gates)           # one EUP pass over all four gates
        i_g = sg[:, 0 * GP:0 * GP + H]
        f_g = sg[:, 1 * GP:1 * GP + H]
        g_g = tg[:, 2 * GP:2 * GP + H]
        o_g = sg[:, 3 * GP:3 * GP + H]
        c = f_g * c + i_g * g_g
        h = o_g * jnp.tanh(c)
        hs_rows.append(h)
    hs = jnp.concatenate(hs_rows, axis=0)              # (T*TB, H), time-major

    # ---- linear head (lane-dense 128-wide output) ---------------------------
    logits = jnp.dot(hs, wlin_t,
                     preferred_element_type=jnp.float32) + b_lin  # (T*TB, 128)

    # ---- softmax over dim 0 (time axis; PyTorch implicit dim for 3-D) ------
    m = logits[0:TB, :]
    for t in range(1, T):
        m = jnp.maximum(m, logits[t * TB:(t + 1) * TB, :])
    exps = [jnp.exp(logits[t * TB:(t + 1) * TB, :] - m) for t in range(T)]
    s = exps[0]
    for t in range(1, T):
        s = s + exps[t]
    inv = 1.0 / s                                      # exact division (1e-5 tol)
    out_ref[0] = jnp.concatenate([e_t * inv for e_t in exps], axis=0)


# ---------------------------------------------------------------------------
# One-time parameter packing (hoisted out of the per-call hot path).
# ---------------------------------------------------------------------------
def _pad_gate_cols(w):
    """(rows, 4H) -> (rows, 128): gate g lives at lanes [g*GATE_PAD, g*GATE_PAD+H)."""
    rows = w.shape[0]
    out = jnp.zeros((rows, 4 * GATE_PAD), jnp.float32)
    for g in range(4):
        out = out.at[:, g * GATE_PAD:g * GATE_PAD + HIDDEN_DIM].set(
            w[:, g * HIDDEN_DIM:(g + 1) * HIDDEN_DIM])
    return out


def prepare_params(params):
    """Pack all weights into a single (96, 128) f32 slab (one DMA per kernel)."""
    emb, wih, whh, bih, bhh, wlin, blin = params
    slab = jnp.zeros((SLAB_ROWS, 4 * GATE_PAD), jnp.float32)
    slab = slab.at[R_EMB:R_EMB + VOCAB_SIZE, :EMBED_DIM].set(emb.astype(jnp.float32))
    slab = slab.at[R_WIH:R_WIH + EMBED_DIM, :].set(
        _pad_gate_cols(wih.T.astype(jnp.float32)))
    slab = slab.at[R_WHH:R_WHH + HIDDEN_DIM, :].set(
        _pad_gate_cols(whh.T.astype(jnp.float32)))
    slab = slab.at[R_B:R_B + 1, :].set(
        _pad_gate_cols((bih + bhh).reshape(1, -1).astype(jnp.float32)))
    slab = slab.at[R_WLIN:R_WLIN + HIDDEN_DIM, :VOCAB_SIZE].set(
        wlin.T.astype(jnp.float32))
    slab = slab.at[R_BLIN, :VOCAB_SIZE].set(blin.astype(jnp.float32))
    return slab


# ---------------------------------------------------------------------------
# Forward wrappers.
# ---------------------------------------------------------------------------
def _batch_tiling(B):
    if B <= 128:
        bp = max(8, ((B + 7) // 8) * 8)
        return bp, bp                     # single tile
    bp = ((B + 127) // 128) * 128
    return bp, 128


@jax.jit
def forward_batched(ids_batch, slab):
    """ids_batch: (B, T) int -> (B, T, VOCAB_SIZE) softmax-over-time probs."""
    B, T = ids_batch.shape
    B_pad, TB = _batch_tiling(B)
    n_tiles = B_pad // TB

    ids_p = jnp.zeros((B_pad, T), jnp.int32).at[:B].set(ids_batch.astype(jnp.int32))
    # Time-major within each tile: flat row index = t*TB + b_local.
    ids_tiles = (ids_p.reshape(n_tiles, TB, T)
                 .transpose(0, 2, 1)
                 .reshape(n_tiles, T * TB, 1))

    out = pl.pallas_call(
        caeser_lstm_kernel,
        out_shape=jax.ShapeDtypeStruct((n_tiles, T * TB, V_PAD), jnp.float32),
        grid=(n_tiles,),
        in_specs=[
            pl.BlockSpec((1, T * TB, 1), lambda j: (j, 0, 0)),
            pl.BlockSpec((SLAB_ROWS, V_PAD), lambda j: (0, 0)),
        ],
        out_specs=pl.BlockSpec((1, T * TB, V_PAD), lambda j: (j, 0, 0)),
        compiler_params=pltpu.CompilerParams(
            dimension_semantics=("parallel",)),
    )(ids_tiles, slab)

    probs = (out.reshape(n_tiles, T, TB, V_PAD)
             .transpose(0, 2, 1, 3)
             .reshape(B_pad, T, V_PAD))
    return probs[:B, :, :VOCAB_SIZE]


def model_forward(x_ids, slab):
    """Module-equivalent forward: (T,) ids -> (T, 1, VOCAB_SIZE), softmax dim=0."""
    probs = forward_batched(x_ids.reshape(1, -1), slab)      # (1, T, V)
    return probs[0].reshape(-1, 1, VOCAB_SIZE)


# ---------------------------------------------------------------------------
# Deterministic parameter init (same shapes as the PyTorch module).
# ---------------------------------------------------------------------------
def init_params(key):
    V, E, H = VOCAB_SIZE, EMBED_DIM, HIDDEN_DIM
    ks = jax.random.split(key, 7)
    k = 1.0 / np.sqrt(H)
    emb = jax.random.normal(ks[0], (V, E), jnp.float32)                 # nn.Embedding
    wih = jax.random.uniform(ks[1], (4 * H, E), jnp.float32, -k, k)     # lstm W_ih
    whh = jax.random.uniform(ks[2], (4 * H, H), jnp.float32, -k, k)     # lstm W_hh
    bih = jax.random.uniform(ks[3], (4 * H,), jnp.float32, -k, k)       # lstm b_ih
    bhh = jax.random.uniform(ks[4], (4 * H,), jnp.float32, -k, k)       # lstm b_hh
    wlin = jax.random.uniform(ks[5], (V, H), jnp.float32, -k, k)        # linear W
    blin = jax.random.uniform(ks[6], (V,), jnp.float32, -k, k)          # linear b
    return emb, wih, whh, bih, bhh, wlin, blin


# ---------------------------------------------------------------------------
# Plain-JAX reference (mirrors the PyTorch forward) for correctness checks.
# ---------------------------------------------------------------------------
def reference_forward(x_ids, params):
    emb_t, wih, whh, bih, bhh, wlin, blin = params
    H = HIDDEN_DIM
    hp = jax.lax.Precision.HIGHEST
    e = emb_t[x_ids]                                        # (T, E)

    def step(carry, x_t):
        h, c = carry
        gates = (jnp.dot(x_t, wih.T, precision=hp) + bih
                 + jnp.dot(h, whh.T, precision=hp) + bhh)
        i = jax.nn.sigmoid(gates[0:H])
        f_ = jax.nn.sigmoid(gates[H:2 * H])
        g = jnp.tanh(gates[2 * H:3 * H])
        o = jax.nn.sigmoid(gates[3 * H:4 * H])
        c = f_ * c + i * g
        h = o * jnp.tanh(c)
        return (h, c), h

    (_, _), hs = lax.scan(step, (jnp.zeros(H), jnp.zeros(H)), e)
    logits = jnp.dot(hs, wlin.T, precision=hp) + blin       # (T, V)
    probs = jax.nn.softmax(logits, axis=0)                  # implicit dim=0 (3-D)
    return probs.reshape(-1, 1, VOCAB_SIZE)


if __name__ == "__main__":
    key = jax.random.PRNGKey(0)
    k_x, k_b, k_p = jax.random.split(key, 3)
    params = init_params(k_p)
    slab = prepare_params(params)        # one-time layout plumbing (not per call)

    # 1) Module-equivalent single-sequence forward (matches PyTorch semantics).
    x = jax.random.randint(k_x, (SEQ_LEN,), 0, VOCAB_SIZE, dtype=jnp.int32)
    out = jax.block_until_ready(model_forward(x, slab))
    ref = reference_forward(x, params)
    np.testing.assert_allclose(np.asarray(out), np.asarray(ref), rtol=1e-5, atol=1e-5)
    assert out.shape == (SEQ_LEN, 1, VOCAB_SIZE)

    # 2) Batched throughput path: batch rows fill MXU sublanes, "parallel" grid.
    B = 256
    xb = jax.random.randint(k_b, (B, SEQ_LEN), 0, VOCAB_SIZE, dtype=jnp.int32)
    outb = jax.block_until_ready(forward_batched(xb, slab))
    refb = jax.vmap(lambda s: reference_forward(s, params)[:, 0, :])(xb)
    np.testing.assert_allclose(np.asarray(outb), np.asarray(refb), rtol=1e-5, atol=1e-5)
    assert outb.shape == (B, SEQ_LEN, VOCAB_SIZE)

    print("KERNEL_OK")
</pallas_src>

<mosaic_0001>
module attributes {stable_mosaic.version = 11 : i64} {
  func.func @caeser_lstm_kernel(%arg0: i32, %arg1: memref<1x64x1xi32, #tpu.memory_space<vmem>>, %arg2: memref<96x128xf32, #tpu.memory_space<vmem>>, %arg3: memref<1x64x128xf32, #tpu.memory_space<vmem>>) attributes {dimension_semantics = [#tpu.dimension_semantics<parallel>], iteration_bounds = array<i64: 1>, scalar_prefetch = 0 : i64, scratch_operands = 0 : i64, tpu.core_type = #tpu.core_type<tc>, window_params = [{transform_indices = @transform_0, window_bounds = array<i64: 1, 64, 1>}, {pipeline_mode = #tpu.pipeline_mode<synchronous>, transform_indices = @transform_1, window_bounds = array<i64: 96, 128>}, {transform_indices = @transform_2, window_bounds = array<i64: 1, 64, 128>}]} {
    %c0 = arith.constant 0 : index
    %c0_0 = arith.constant 0 : index
    %0 = vector.load %arg2[%c0, %c0_0] : memref<96x128xf32, #tpu.memory_space<vmem>>, vector<32x10xf32>
    %c32 = arith.constant 32 : index
    %c0_1 = arith.constant 0 : index
    %1 = vector.load %arg2[%c32, %c0_1] : memref<96x128xf32, #tpu.memory_space<vmem>>, vector<10x128xf32>
    %c48 = arith.constant 48 : index
    %c0_2 = arith.constant 0 : index
    %2 = vector.load %arg2[%c48, %c0_2] : memref<96x128xf32, #tpu.memory_space<vmem>>, vector<10x128xf32>
    %c64 = arith.constant 64 : index
    %c0_3 = arith.constant 0 : index
    %3 = vector.load %arg2[%c64, %c0_3] : memref<96x128xf32, #tpu.memory_space<vmem>>, vector<1x128xf32>
    %c72 = arith.constant 72 : index
    %c0_4 = arith.constant 0 : index
    %4 = vector.load %arg2[%c72, %c0_4] : memref<96x128xf32, #tpu.memory_space<vmem>>, vector<10x128xf32>
    %c88 = arith.constant 88 : index
    %c0_5 = arith.constant 0 : index
    %5 = vector.load %arg2[%c88, %c0_5] : memref<96x128xf32, #tpu.memory_space<vmem>>, vector<1x128xf32>
    %c0_6 = arith.constant 0 : index
    %c0_7 = arith.constant 0 : index
    %c0_8 = arith.constant 0 : index
    %6 = vector.load %arg1[%c0_6, %c0_7, %c0_8] : memref<1x64x1xi32, #tpu.memory_space<vmem>>, vector<1x64x1xi32>
    %7 = vector.shape_cast %6 : vector<1x64x1xi32> to vector<64x1xi32>
    %8 = tpu.iota {dimensions = array<i32: 1>} : vector<64x32xi32>
    %9 = vector.broadcast %7 : vector<64x1xi32> to vector<64x32xi32>
    %10 = arith.cmpi eq, %8, %9 : vector<64x32xi32>
    %11 = arith.extui %10 : vector<64x32xi1> to vector<64x32xi32>
    %12 = arith.sitofp %11 : vector<64x32xi32> to vector<64x32xf32>
    %cst = arith.constant dense<0.000000e+00> : vector<64x10xf32>
    %13 = tpu.matmul %12, %0, %cst {dimension_numbers = #tpu.dot_dimension_numbers<[1], [0], [0], [1], [0, 0, 1, 1], [], []>} : vector<64x32xf32>, vector<32x10xf32>, vector<64x10xf32> -> vector<64x10xf32>
    %cst_9 = arith.constant dense<0.000000e+00> : vector<64x128xf32>
    %14 = tpu.matmul %13, %1, %cst_9 {dimension_numbers = #tpu.dot_dimension_numbers<[1], [0], [0], [1], [0, 0, 1, 1], [], []>} : vector<64x10xf32>, vector<10x128xf32>, vector<64x128xf32> -> vector<64x128xf32>
    %15 = vector.broadcast %3 : vector<1x128xf32> to vector<64x128xf32>
    %16 = arith.addf %14, %15 : vector<64x128xf32>
    %cst_10 = arith.constant 0.000000e+00 : f32
    %17 = vector.broadcast %cst_10 : f32 to vector<8x10xf32>
    %cst_11 = arith.constant 0.000000e+00 : f32
    %18 = vector.broadcast %cst_11 : f32 to vector<8x10xf32>
    %19 = vector.extract_strided_slice %16 {offsets = [0, 0], sizes = [8, 128], strides = [1, 1]} : vector<64x128xf32> to vector<8x128xf32>
    %cst_12 = arith.constant dense<0.000000e+00> : vector<8x128xf32>
    %20 = tpu.matmul %17, %2, %cst_12 {dimension_numbers = #tpu.dot_dimension_numbers<[1], [0], [0], [1], [0, 0, 1, 1], [], []>} : vector<8x10xf32>, vector<10x128xf32>, vector<8x128xf32> -> vector<8x128xf32>
    %21 = arith.addf %19, %20 : vector<8x128xf32>
    %22 = arith.negf %21 : vector<8x128xf32>
    %23 = math.exp %22 : vector<8x128xf32>
    %cst_13 = arith.constant 1.000000e+00 : f32
    %24 = vector.broadcast %cst_13 : f32 to vector<8x128xf32>
    %25 = arith.addf %24, %23 : vector<8x128xf32>
    %26 = arith.divf %24, %25 : vector<8x128xf32>
    %27 = math.tanh %21 : vector<8x128xf32>
    %28 = vector.extract_strided_slice %26 {offsets = [0, 0], sizes = [8, 10], strides = [1, 1]} : vector<8x128xf32> to vector<8x10xf32>
    %29 = vector.extract_strided_slice %26 {offsets = [0, 32], sizes = [8, 10], strides = [1, 1]} : vector<8x128xf32> to vector<8x10xf32>
    %30 = vector.extract_strided_slice %27 {offsets = [0, 64], sizes = [8, 10], strides = [1, 1]} : vector<8x128xf32> to vector<8x10xf32>
    %31 = vector.extract_strided_slice %26 {offsets = [0, 96], sizes = [8, 10], strides = [1, 1]} : vector<8x128xf32> to vector<8x10xf32>
    %32 = arith.mulf %29, %18 : vector<8x10xf32>
    %33 = arith.mulf %28, %30 : vector<8x10xf32>
    %34 = arith.addf %32, %33 : vector<8x10xf32>
    %35 = math.tanh %34 : vector<8x10xf32>
    %36 = arith.mulf %31, %35 : vector<8x10xf32>
    %37 = vector.extract_strided_slice %16 {offsets = [8, 0], sizes = [8, 128], strides = [1, 1]} : vector<64x128xf32> to vector<8x128xf32>
    %cst_14 = arith.constant dense<0.000000e+00> : vector<8x128xf32>
    %38 = tpu.matmul %36, %2, %cst_14 {dimension_numbers = #tpu.dot_dimension_numbers<[1], [0], [0], [1], [0, 0, 1, 1], [], []>} : vector<8x10xf32>, vector<10x128xf32>, vector<8x128xf32> -> vector<8x128xf32>
    %39 = arith.addf %37, %38 : vector<8x128xf32>
    %40 = arith.negf %39 : vector<8x128xf32>
    %41 = math.exp %40 : vector<8x128xf32>
    %cst_15 = arith.constant 1.000000e+00 : f32
    %42 = vector.broadcast %cst_15 : f32 to vector<8x128xf32>
    %43 = arith.addf %42, %41 : vector<8x128xf32>
    %44 = arith.divf %42, %43 : vector<8x128xf32>
    %45 = math.tanh %39 : vector<8x128xf32>
    %46 = vector.extract_strided_slice %44 {offsets = [0, 0], sizes = [8, 10], strides = [1, 1]} : vector<8x128xf32> to vector<8x10xf32>
    %47 = vector.extract_strided_slice %44 {offsets = [0, 32], sizes = [8, 10], strides = [1, 1]} : vector<8x128xf32> to vector<8x10xf32>
    %48 = vector.extract_strided_slice %45 {offsets = [0, 64], sizes = [8, 10], strides = [1, 1]} : vector<8x128xf32> to vector<8x10xf32>
    %49 = vector.extract_strided_slice %44 {offsets = [0, 96], sizes = [8, 10], strides = [1, 1]} : vector<8x128xf32> to vector<8x10xf32>
    %50 = arith.mulf %47, %34 : vector<8x10xf32>
    %51 = arith.mulf %46, %48 : vector<8x10xf32>
    %52 = arith.addf %50, %51 : vector<8x10xf32>
    %53 = math.tanh %52 : vector<8x10xf32>
    %54 = arith.mulf %49, %53 : vector<8x10xf32>
    %55 = vector.extract_strided_slice %16 {offsets = [16, 0], sizes = [8, 128], strides = [1, 1]} : vector<64x128xf32> to vector<8x128xf32>
    %cst_16 = arith.constant dense<0.000000e+00> : vector<8x128xf32>
    %56 = tpu.matmul %54, %2, %cst_16 {dimension_numbers = #tpu.dot_dimension_numbers<[1], [0], [0], [1], [0, 0, 1, 1], [], []>} : vector<8x10xf32>, vector<10x128xf32>, vector<8x128xf32> -> vector<8x128xf32>
    %57 = arith.addf %55, %56 : vector<8x128xf32>
    %58 = arith.negf %57 : vector<8x128xf32>
    %59 = math.exp %58 : vector<8x128xf32>
    %cst_17 = arith.constant 1.000000e+00 : f32
    %60 = vector.broadcast %cst_17 : f32 to vector<8x128xf32>
    %61 = arith.addf %60, %59 : vector<8x128xf32>
    %62 = arith.divf %60, %61 : vector<8x128xf32>
    %63 = math.tanh %57 : vector<8x128xf32>
    %64 = vector.extract_strided_slice %62 {offsets = [0, 0], sizes = [8, 10], strides = [1, 1]} : vector<8x128xf32> to vector<8x10xf32>
    %65 = vector.extract_strided_slice %62 {offsets = [0, 32], sizes = [8, 10], strides = [1, 1]} : vector<8x128xf32> to vector<8x10xf32>
    %66 = vector.extract_strided_slice %63 {offsets = [0, 64], sizes = [8, 10], strides = [1, 1]} : vector<8x128xf32> to vector<8x10xf32>
    %67 = vector.extract_strided_slice %62 {offsets = [0, 96], sizes = [8, 10], strides = [1, 1]} : vector<8x128xf32> to vector<8x10xf32>
    %68 = arith.mulf %65, %52 : vector<8x10xf32>
    %69 = arith.mulf %64, %66 : vector<8x10xf32>
    %70 = arith.addf %68, %69 : vector<8x10xf32>
    %71 = math.tanh %70 : vector<8x10xf32>
    %72 = arith.mulf %67, %71 : vector<8x10xf32>
    %73 = vector.extract_strided_slice %16 {offsets = [24, 0], sizes = [8, 128], strides = [1, 1]} : vector<64x128xf32> to vector<8x128xf32>
    %cst_18 = arith.constant dense<0.000000e+00> : vector<8x128xf32>
    %74 = tpu.matmul %72, %2, %cst_18 {dimension_numbers = #tpu.dot_dimension_numbers<[1], [0], [0], [1], [0, 0, 1, 1], [], []>} : vector<8x10xf32>, vector<10x128xf32>, vector<8x128xf32> -> vector<8x128xf32>
    %75 = arith.addf %73, %74 : vector<8x128xf32>
    %76 = arith.negf %75 : vector<8x128xf32>
    %77 = math.exp %76 : vector<8x128xf32>
    %cst_19 = arith.constant 1.000000e+00 : f32
    %78 = vector.broadcast %cst_19 : f32 to vector<8x128xf32>
    %79 = arith.addf %78, %77 : vector<8x128xf32>
    %80 = arith.divf %78, %79 : vector<8x128xf32>
    %81 = math.tanh %75 : vector<8x128xf32>
    %82 = vector.extract_strided_slice %80 {offsets = [0, 0], sizes = [8, 10], strides = [1, 1]} : vector<8x128xf32> to vector<8x10xf32>
    %83 = vector.extract_strided_slice %80 {offsets = [0, 32], sizes = [8, 10], strides = [1, 1]} : vector<8x128xf32> to vector<8x10xf32>
    %84 = vector.extract_strided_slice %81 {offsets = [0, 64], sizes = [8, 10], strides = [1, 1]} : vector<8x128xf32> to vector<8x10xf32>
    %85 = vector.extract_strided_slice %80 {offsets = [0, 96], sizes = [8, 10], strides = [1, 1]} : vector<8x128xf32> to vector<8x10xf32>
    %86 = arith.mulf %83, %70 : vector<8x10xf32>
    %87 = arith.mulf %82, %84 : vector<8x10xf32>
    %88 = arith.addf %86, %87 : vector<8x10xf32>
    %89 = math.tanh %88 : vector<8x10xf32>
    %90 = arith.mulf %85, %89 : vector<8x10xf32>
    %91 = vector.extract_strided_slice %16 {offsets = [32, 0], sizes = [8, 128], strides = [1, 1]} : vector<64x128xf32> to vector<8x128xf32>
    %cst_20 = arith.constant dense<0.000000e+00> : vector<8x128xf32>
    %92 = tpu.matmul %90, %2, %cst_20 {dimension_numbers = #tpu.dot_dimension_numbers<[1], [0], [0], [1], [0, 0, 1, 1], [], []>} : vector<8x10xf32>, vector<10x128xf32>, vector<8x128xf32> -> vector<8x128xf32>
    %93 = arith.addf %91, %92 : vector<8x128xf32>
    %94 = arith.negf %93 : vector<8x128xf32>
    %95 = math.exp %94 : vector<8x128xf32>
    %cst_21 = arith.constant 1.000000e+00 : f32
    %96 = vector.broadcast %cst_21 : f32 to vector<8x128xf32>
    %97 = arith.addf %96, %95 : vector<8x128xf32>
    %98 = arith.divf %96, %97 : vector<8x128xf32>
    %99 = math.tanh %93 : vector<8x128xf32>
    %100 = vector.extract_strided_slice %98 {offsets = [0, 0], sizes = [8, 10], strides = [1, 1]} : vector<8x128xf32> to vector<8x10xf32>
    %101 = vector.extract_strided_slice %98 {offsets = [0, 32], sizes = [8, 10], strides = [1, 1]} : vector<8x128xf32> to vector<8x10xf32>
    %102 = vector.extract_strided_slice %99 {offsets = [0, 64], sizes = [8, 10], strides = [1, 1]} : vector<8x128xf32> to vector<8x10xf32>
    %103 = vector.extract_strided_slice %98 {offsets = [0, 96], sizes = [8, 10], strides = [1, 1]} : vector<8x128xf32> to vector<8x10xf32>
    %104 = arith.mulf %101, %88 : vector<8x10xf32>
    %105 = arith.mulf %100, %102 : vector<8x10xf32>
    %106 = arith.addf %104, %105 : vector<8x10xf32>
    %107 = math.tanh %106 : vector<8x10xf32>
    %108 = arith.mulf %103, %107 : vector<8x10xf32>
    %109 = vector.extract_strided_slice %16 {offsets = [40, 0], sizes = [8, 128], strides = [1, 1]} : vector<64x128xf32> to vector<8x128xf32>
    %cst_22 = arith.constant dense<0.000000e+00> : vector<8x128xf32>
    %110 = tpu.matmul %108, %2, %cst_22 {dimension_numbers = #tpu.dot_dimension_numbers<[1], [0], [0], [1], [0, 0, 1, 1], [], []>} : vector<8x10xf32>, vector<10x128xf32>, vector<8x128xf32> -> vector<8x128xf32>
    %111 = arith.addf %109, %110 : vector<8x128xf32>
    %112 = arith.negf %111 : vector<8x128xf32>
    %113 = math.exp %112 : vector<8x128xf32>
    %cst_23 = arith.constant 1.000000e+00 : f32
    %114 = vector.broadcast %cst_23 : f32 to vector<8x128xf32>
    %115 = arith.addf %114, %113 : vector<8x128xf32>
    %116 = arith.divf %114, %115 : vector<8x128xf32>
    %117 = math.tanh %111 : vector<8x128xf32>
    %118 = vector.extract_strided_slice %116 {offsets = [0, 0], sizes = [8, 10], strides = [1, 1]} : vector<8x128xf32> to vector<8x10xf32>
    %119 = vector.extract_strided_slice %116 {offsets = [0, 32], sizes = [8, 10], strides = [1, 1]} : vector<8x128xf32> to vector<8x10xf32>
    %120 = vector.extract_strided_slice %117 {offsets = [0, 64], sizes = [8, 10], strides = [1, 1]} : vector<8x128xf32> to vector<8x10xf32>
    %121 = vector.extract_strided_slice %116 {offsets = [0, 96], sizes = [8, 10], strides = [1, 1]} : vector<8x128xf32> to vector<8x10xf32>
    %122 = arith.mulf %119, %106 : vector<8x10xf32>
    %123 = arith.mulf %118, %120 : vector<8x10xf32>
    %124 = arith.addf %122, %123 : vector<8x10xf32>
    %125 = math.tanh %124 : vector<8x10xf32>
    %126 = arith.mulf %121, %125 : vector<8x10xf32>
    %127 = vector.extract_strided_slice %16 {offsets = [48, 0], sizes = [8, 128], strides = [1, 1]} : vector<64x128xf32> to vector<8x128xf32>
    %cst_24 = arith.constant dense<0.000000e+00> : vector<8x128xf32>
    %128 = tpu.matmul %126, %2, %cst_24 {dimension_numbers = #tpu.dot_dimension_numbers<[1], [0], [0], [1], [0, 0, 1, 1], [], []>} : vector<8x10xf32>, vector<10x128xf32>, vector<8x128xf32> -> vector<8x128xf32>
    %129 = arith.addf %127, %128 : vector<8x128xf32>
    %130 = arith.negf %129 : vector<8x128xf32>
    %131 = math.exp %130 : vector<8x128xf32>
    %cst_25 = arith.constant 1.000000e+00 : f32
    %132 = vector.broadcast %cst_25 : f32 to vector<8x128xf32>
    %133 = arith.addf %132, %131 : vector<8x128xf32>
    %134 = arith.divf %132, %133 : vector<8x128xf32>
    %135 = math.tanh %129 : vector<8x128xf32>
    %136 = vector.extract_strided_slice %134 {offsets = [0, 0], sizes = [8, 10], strides = [1, 1]} : vector<8x128xf32> to vector<8x10xf32>
    %137 = vector.extract_strided_slice %134 {offsets = [0, 32], sizes = [8, 10], strides = [1, 1]} : vector<8x128xf32> to vector<8x10xf32>
    %138 = vector.extract_strided_slice %135 {offsets = [0, 64], sizes = [8, 10], strides = [1, 1]} : vector<8x128xf32> to vector<8x10xf32>
    %139 = vector.extract_strided_slice %134 {offsets = [0, 96], sizes = [8, 10], strides = [1, 1]} : vector<8x128xf32> to vector<8x10xf32>
    %140 = arith.mulf %137, %124 : vector<8x10xf32>
    %141 = arith.mulf %136, %138 : vector<8x10xf32>
    %142 = arith.addf %140, %141 : vector<8x10xf32>
    %143 = math.tanh %142 : vector<8x10xf32>
    %144 = arith.mulf %139, %143 : vector<8x10xf32>
    %145 = vector.extract_strided_slice %16 {offsets = [56, 0], sizes = [8, 128], strides = [1, 1]} : vector<64x128xf32> to vector<8x128xf32>
    %cst_26 = arith.constant dense<0.000000e+00> : vector<8x128xf32>
    %146 = tpu.matmul %144, %2, %cst_26 {dimension_numbers = #tpu.dot_dimension_numbers<[1], [0], [0], [1], [0, 0, 1, 1], [], []>} : vector<8x10xf32>, vector<10x128xf32>, vector<8x128xf32> -> vector<8x128xf32>
    %147 = arith.addf %145, %146 : vector<8x128xf32>
    %148 = arith.negf %147 : vector<8x128xf32>
    %149 = math.exp %148 : vector<8x128xf32>
    %cst_27 = arith.constant 1.000000e+00 : f32
    %150 = vector.broadcast %cst_27 : f32 to vector<8x128xf32>
    %151 = arith.addf %150, %149 : vector<8x128xf32>
    %152 = arith.divf %150, %151 : vector<8x128xf32>
    %153 = math.tanh %147 : vector<8x128xf32>
    %154 = vector.extract_strided_slice %152 {offsets = [0, 0], sizes = [8, 10], strides = [1, 1]} : vector<8x128xf32> to vector<8x10xf32>
    %155 = vector.extract_strided_slice %152 {offsets = [0, 32], sizes = [8, 10], strides = [1, 1]} : vector<8x128xf32> to vector<8x10xf32>
    %156 = vector.extract_strided_slice %153 {offsets = [0, 64], sizes = [8, 10], strides = [1, 1]} : vector<8x128xf32> to vector<8x10xf32>
    %157 = vector.extract_strided_slice %152 {offsets = [0, 96], sizes = [8, 10], strides = [1, 1]} : vector<8x128xf32> to vector<8x10xf32>
    %158 = arith.mulf %155, %142 : vector<8x10xf32>
    %159 = arith.mulf %154, %156 : vector<8x10xf32>
    %160 = arith.addf %158, %159 : vector<8x10xf32>
    %161 = math.tanh %160 : vector<8x10xf32>
    %162 = arith.mulf %157, %161 : vector<8x10xf32>
    %163 = tpu.concatenate %36, %54, %72, %90, %108, %126, %144, %162 in 0 : vector<8x10xf32>, vector<8x10xf32>, vector<8x10xf32>, vector<8x10xf32>, vector<8x10xf32>, vector<8x10xf32>, vector<8x10xf32>, vector<8x10xf32> -> vector<64x10xf32>
    %cst_28 = arith.constant dense<0.000000e+00> : vector<64x128xf32>
    %164 = tpu.matmul %163, %4, %cst_28 {dimension_numbers = #tpu.dot_dimension_numbers<[1], [0], [0], [1], [0, 0, 1, 1], [], []>} : vector<64x10xf32>, vector<10x128xf32>, vector<64x128xf32> -> vector<64x128xf32>
    %165 = vector.broadcast %5 : vector<1x128xf32> to vector<64x128xf32>
    %166 = arith.addf %164, %165 : vector<64x128xf32>
    %167 = vector.extract_strided_slice %166 {offsets = [0, 0], sizes = [8, 128], strides = [1, 1]} : vector<64x128xf32> to vector<8x128xf32>
    %168 = vector.extract_strided_slice %166 {offsets = [8, 0], sizes = [8, 128], strides = [1, 1]} : vector<64x128xf32> to vector<8x128xf32>
    %169 = arith.maximumf %167, %168 : vector<8x128xf32>
    %170 = vector.extract_strided_slice %166 {offsets = [16, 0], sizes = [8, 128], strides = [1, 1]} : vector<64x128xf32> to vector<8x128xf32>
    %171 = arith.maximumf %169, %170 : vector<8x128xf32>
    %172 = vector.extract_strided_slice %166 {offsets = [24, 0], sizes = [8, 128], strides = [1, 1]} : vector<64x128xf32> to vector<8x128xf32>
    %173 = arith.maximumf %171, %172 : vector<8x128xf32>
    %174 = vector.extract_strided_slice %166 {offsets = [32, 0], sizes = [8, 128], strides = [1, 1]} : vector<64x128xf32> to vector<8x128xf32>
    %175 = arith.maximumf %173, %174 : vector<8x128xf32>
    %176 = vector.extract_strided_slice %166 {offsets = [40, 0], sizes = [8, 128], strides = [1, 1]} : vector<64x128xf32> to vector<8x128xf32>
    %177 = arith.maximumf %175, %176 : vector<8x128xf32>
    %178 = vector.extract_strided_slice %166 {offsets = [48, 0], sizes = [8, 128], strides = [1, 1]} : vector<64x128xf32> to vector<8x128xf32>
    %179 = arith.maximumf %177, %178 : vector<8x128xf32>
    %180 = vector.extract_strided_slice %166 {offsets = [56, 0], sizes = [8, 128], strides = [1, 1]} : vector<64x128xf32> to vector<8x128xf32>
    %181 = arith.maximumf %179, %180 : vector<8x128xf32>
    %182 = vector.extract_strided_slice %166 {offsets = [0, 0], sizes = [8, 128], strides = [1, 1]} : vector<64x128xf32> to vector<8x128xf32>
    %183 = arith.subf %182, %181 : vector<8x128xf32>
    %184 = math.exp %183 : vector<8x128xf32>
    %185 = vector.extract_strided_slice %166 {offsets = [8, 0], sizes = [8, 128], strides = [1, 1]} : vector<64x128xf32> to vector<8x128xf32>
    %186 = arith.subf %185, %181 : vector<8x128xf32>
    %187 = math.exp %186 : vector<8x128xf32>
    %188 = vector.extract_strided_slice %166 {offsets = [16, 0], sizes = [8, 128], strides = [1, 1]} : vector<64x128xf32> to vector<8x128xf32>
    %189 = arith.subf %188, %181 : vector<8x128xf32>
    %190 = math.exp %189 : vector<8x128xf32>
    %191 = vector.extract_strided_slice %166 {offsets = [24, 0], sizes = [8, 128], strides = [1, 1]} : vector<64x128xf32> to vector<8x128xf32>
    %192 = arith.subf %191, %181 : vector<8x128xf32>
    %193 = math.exp %192 : vector<8x128xf32>
    %194 = vector.extract_strided_slice %166 {offsets = [32, 0], sizes = [8, 128], strides = [1, 1]} : vector<64x128xf32> to vector<8x128xf32>
    %195 = arith.subf %194, %181 : vector<8x128xf32>
    %196 = math.exp %195 : vector<8x128xf32>
    %197 = vector.extract_strided_slice %166 {offsets = [40, 0], sizes = [8, 128], strides = [1, 1]} : vector<64x128xf32> to vector<8x128xf32>
    %198 = arith.subf %197, %181 : vector<8x128xf32>
    %199 = math.exp %198 : vector<8x128xf32>
    %200 = vector.extract_strided_slice %166 {offsets = [48, 0], sizes = [8, 128], strides = [1, 1]} : vector<64x128xf32> to vector<8x128xf32>
    %201 = arith.subf %200, %181 : vector<8x128xf32>
    %202 = math.exp %201 : vector<8x128xf32>
    %203 = vector.extract_strided_slice %166 {offsets = [56, 0], sizes = [8, 128], strides = [1, 1]} : vector<64x128xf32> to vector<8x128xf32>
    %204 = arith.subf %203, %181 : vector<8x128xf32>
    %205 = math.exp %204 : vector<8x128xf32>
    %206 = arith.addf %184, %187 : vector<8x128xf32>
    %207 = arith.addf %206, %190 : vector<8x128xf32>
    %208 = arith.addf %207, %193 : vector<8x128xf32>
    %209 = arith.addf %208, %196 : vector<8x128xf32>
    %210 = arith.addf %209, %199 : vector<8x128xf32>
    %211 = arith.addf %210, %202 : vector<8x128xf32>
    %212 = arith.addf %211, %205 : vector<8x128xf32>
    %cst_29 = arith.constant 1.000000e+00 : f32
    %213 = vector.broadcast %cst_29 : f32 to vector<8x128xf32>
    %214 = arith.divf %213, %212 : vector<8x128xf32>
    %215 = arith.mulf %184, %214 : vector<8x128xf32>
    %216 = arith.mulf %187, %214 : vector<8x128xf32>
    %217 = arith.mulf %190, %214 : vector<8x128xf32>
    %218 = arith.mulf %193, %214 : vector<8x128xf32>
    %219 = arith.mulf %196, %214 : vector<8x128xf32>
    %220 = arith.mulf %199, %214 : vector<8x128xf32>
    %221 = arith.mulf %202, %214 : vector<8x128xf32>
    %222 = arith.mulf %205, %214 : vector<8x128xf32>
    %223 = tpu.concatenate %215, %216, %217, %218, %219, %220, %221, %222 in 0 : vector<8x128xf32>, vector<8x128xf32>, vector<8x128xf32>, vector<8x128xf32>, vector<8x128xf32>, vector<8x128xf32>, vector<8x128xf32>, vector<8x128xf32> -> vector<64x128xf32>
    %c0_30 = arith.constant 0 : index
    %c0_31 = arith.constant 0 : index
    %c0_32 = arith.constant 0 : index
    %224 = vector.load %arg3[%c0_30, %c0_31, %c0_32] : memref<1x64x128xf32, #tpu.memory_space<vmem>>, vector<1x64x128xf32>
    %225 = vector.shape_cast %224 : vector<1x64x128xf32> to vector<64x128xf32>
    %226 = vector.shape_cast %223 : vector<64x128xf32> to vector<1x64x128xf32>
    tpu.vector_store %arg3[%c0_30, %c0_31, %c0_32], %226 {strides = array<i32>} : memref<1x64x128xf32, #tpu.memory_space<vmem>>, vector<1x64x128xf32>,
    return
  }
  func.func @transform_0(%arg0: i32) -> (i32, i32, i32) {
    %c0_i32 = arith.constant 0 : i32
    %c0_i32_0 = arith.constant 0 : i32
    %c0_i32_1 = arith.constant 0 : i32
    return %arg0, %c0_i32, %c0_i32_0 : i32, i32, i32
  }
  func.func @transform_1(%arg0: i32) -> (i32, i32) {
    %c0_i32 = arith.constant 0 : i32
    %c0_i32_0 = arith.constant 0 : i32
    %c0_i32_1 = arith.constant 0 : i32
    return %c0_i32, %c0_i32_0 : i32, i32
  }
  func.func @transform_2(%arg0: i32) -> (i32, i32, i32) {
    %c0_i32 = arith.constant 0 : i32
    %c0_i32_0 = arith.constant 0 : i32
    %c0_i32_1 = arith.constant 0 : i32
    return %arg0, %c0_i32, %c0_i32_0 : i32, i32, i32
  }
}

</mosaic_0001>

<llo_original>
// kernel: forward_batched.1
$region0: #{forward_batched.1}
  #allocation0 [shape = 'u32[]', space=smem, size = 0x4, offset = 0x4, fixed_abs, tag = 'smem constant byte address 0x4 - core index']
  #allocation1 [shape = 'u32[72,128]{1,0:T(1,128)}', space=vmem, size = 0x9000, scoped, tag = 'internal scratch']
  %s0 = inlined_call_operand.vmem [shape: s32[1,64,1], index: 0, kind: input, shape index: {}]
  %s1 = inlined_call_operand.vmem [shape: f32[96,128], index: 1, kind: input, shape index: {}]
  %s2 = inlined_call_operand.vmem [shape: f32[1,64,128], index: 2, kind: output, shape index: {}]
  %s3 = sld [smem:[#allocation0]]
  $region18: #{forward_batched.1} parent=0
    _
  %s5 = ssub.s32 1, %s3
  %s6 = scalar_select 0, %s5, %s3
  // Predicated region
  $region2: #{forward_batched.1} parent=0 // pred_check
    _
  $region3: #{forward_batched.1} parent=0 // pred_check_branch
    %8 = sbr.rel (0) target = $region5
  $region4: #{forward_batched.1} parent=0 // pred_region
    _
  $region5: #{forward_batched.1} parent=0 // pred_fallthru
    _
  // Predicated region
  $region6: #{forward_batched.1} parent=0 // pred_check
    _
  $region7: #{forward_batched.1} parent=0 // pred_check_branch
    %10 = sbr.rel (0) target = $region9
  $region8: #{forward_batched.1} parent=0 // pred_region
    _
  $region9: #{forward_batched.1} parent=0 // pred_fallthru
    _
  %v11 = vld [vmem:[%s1] sm:$0xff]
  %v12 = vld [vmem:[%s1 + $0x8] sm:$0xff]
  %v13 = vld [vmem:[%s1 + $0x10] sm:$0xff]
  %v14 = vld [vmem:[%s1 + $0x18] sm:$0xff]
  %v15 = vld [vmem:[%s1 + $0x20] sm:$0xff]
  %v16 = vld [vmem:[%s1 + $0x28] sm:$0x3]
  %v17 = vld [vmem:[%s1 + $0x30] sm:$0xff]
  %v18 = vld [vmem:[%s1 + $0x38] sm:$0x3]
  %v19 = vld [vmem:[%s1 + $0x40] sm:$0x1]
  %v20 = vld [vmem:[%s1 + $0x48] sm:$0xff]
  %v21 = vld [vmem:[%s1 + $0x50] sm:$0x3]
  %v22 = vld [vmem:[%s1 + $0x58] sm:$0x1]
  %v23 = vld [vmem:[%s0] sm:$0xff]
  %v24 = vld [vmem:[%s0 + $0x8] sm:$0xff]
  %v25 = vld [vmem:[%s0 + $0x10] sm:$0xff]
  %v26 = vld [vmem:[%s0 + $0x18] sm:$0xff]
  %v27 = vld [vmem:[%s0 + $0x20] sm:$0xff]
  %v28 = vld [vmem:[%s0 + $0x28] sm:$0xff]
  %v29 = vld [vmem:[%s0 + $0x30] sm:$0xff]
  %v30 = vld [vmem:[%s0 + $0x38] sm:$0xff]
  %v31 = vlaneseq
  %v32 = vand.u32 %v31, 127
  %33 = vset.pattern.permute.xlu0 0
  %34 = vperm.xlu0 %33, %v23
  %v35 = vpop.permute.xlu0 %34
  %36 = vset.pattern.permute.xlu0 0
  %37 = vperm.xlu0 %36, %v24
  %v38 = vpop.permute.xlu0 %37
  %39 = vset.pattern.permute.xlu0 0
  %40 = vperm.xlu0 %39, %v25
  %v41 = vpop.permute.xlu0 %40
  %42 = vset.pattern.permute.xlu0 0
  %43 = vperm.xlu0 %42, %v26
  %v44 = vpop.permute.xlu0 %43
  %45 = vset.pattern.permute.xlu0 0
  %46 = vperm.xlu0 %45, %v27
  %v47 = vpop.permute.xlu0 %46
  %48 = vset.pattern.permute.xlu0 0
  %49 = vperm.xlu0 %48, %v28
  %v50 = vpop.permute.xlu0 %49
  %51 = vset.pattern.permute.xlu0 0
  %52 = vperm.xlu0 %51, %v29
  %v53 = vpop.permute.xlu0 %52
  %54 = vset.pattern.permute.xlu0 0
  %55 = vperm.xlu0 %54, %v30
  %v56 = vpop.permute.xlu0 %55
  %vm57 = vcmp.eq.s32.totalorder %v32, %v35
  %vm58 = vcmp.eq.s32.totalorder %v32, %v38
  %vm59 = vcmp.eq.s32.totalorder %v32, %v41
  %vm60 = vcmp.eq.s32.totalorder %v32, %v44
  %vm61 = vcmp.eq.s32.totalorder %v32, %v47
  %vm62 = vcmp.eq.s32.totalorder %v32, %v50
  %vm63 = vcmp.eq.s32.totalorder %v32, %v53
  %vm64 = vcmp.eq.s32.totalorder %v32, %v56
  %v65 = vsel %vm57, 1, 0
  %v66 = vsel %vm58, 1, 0
  %v67 = vsel %vm59, 1, 0
  %v68 = vsel %vm60, 1, 0
  %v69 = vsel %vm61, 1, 0
  %v70 = vsel %vm62, 1, 0
  %v71 = vsel %vm63, 1, 0
  %v72 = vsel %vm64, 1, 0
  %v73 = vcvt.s32.f32 %v65
  %v74 = vcvt.s32.f32 %v66
  %v75 = vcvt.s32.f32 %v67
  %v76 = vcvt.s32.f32 %v68
  %v77 = vcvt.s32.f32 %v69
  %v78 = vcvt.s32.f32 %v70
  %v79 = vcvt.s32.f32 %v71
  %v80 = vcvt.s32.f32 %v72
  %vm81 = vcmask 261120
  %v83 = vsel %vm81, %v73, 0
  %v86 = vsel %vm81, %v74, 0
  %v89 = vsel %vm81, %v75, 0
  %v92 = vsel %vm81, %v76, 0
  %v95 = vsel %vm81, %v77, 0
  %v98 = vsel %vm81, %v78, 0
  %v101 = vsel %vm81, %v79, 0
  %v104 = vsel %vm81, %v80, 0
  %106 = vmatpush.msra.mxu0 0.0
  %107 = vmatpush.msra.mxu0 0.0
  %108 = vmatpush.msra.mxu0 0.0
  %109 = vmatpush.msra.mxu0 0.0
  %110 = vmatpush.msra.mxu0 0.0
  %111 = vmatpush.msra.mxu0 0.0
  %112 = vmatpush.msra.mxu0 0.0
  %113 = vmatpush.msra.mxu0 0.0
  %114 = vmatpush.msra.mxu0 0.0
  %115 = vmatpush.msra.mxu0 0.0
  %116 = vmatpush.msra.mxu0 0.0
  %117 = vmatpush.msra.mxu0 0.0
  %118 = vmatpush.msra.mxu0 %v14
  %119 = vmatpush.msra.mxu0 %v13
  %120 = vmatpush.msra.mxu0 %v12
  %121 = vmatpush.msra.mxu0 %v11
  %122 = vmatmul.f32.gmra.mxu0 %v83
  %v123 = vpop.f32.mrf.mxu0
  %v124 = vadd.f32 0.0, %v123
  %125 = vmatmul.f32.gmra.mxu0 %v86
  %v126 = vpop.f32.mrf.mxu0
  %v127 = vadd.f32 0.0, %v126
  %128 = vmatmul.f32.gmra.mxu0 %v89
  %v129 = vpop.f32.mrf.mxu0
  %v130 = vadd.f32 0.0, %v129
  %131 = vmatmul.f32.gmra.mxu0 %v92
  %v132 = vpop.f32.mrf.mxu0
  %v133 = vadd.f32 0.0, %v132
  %134 = vmatmul.f32.gmra.mxu0 %v95
  %v135 = vpop.f32.mrf.mxu0
  %v136 = vadd.f32 0.0, %v135
  %137 = vmatmul.f32.gmra.mxu0 %v98
  %v138 = vpop.f32.mrf.mxu0
  %v139 = vadd.f32 0.0, %v138
  %140 = vmatmul.f32.gmra.mxu0 %v101
  %v141 = vpop.f32.mrf.mxu0
  %v142 = vadd.f32 0.0, %v141
  %143 = vmatmul.f32.gmra.mxu0 %v104
  %v144 = vpop.f32.mrf.mxu0
  %v145 = vadd.f32 0.0, %v144
  %146 = vdwg.mxu0
  %v147 = vperm.slane %v19, 0
  %vm148 = vcmask 80896
  %v150 = vsel %vm148, %v124, 0
  %v153 = vsel %vm148, %v127, 0
  %v156 = vsel %vm148, %v130, 0
  %v159 = vsel %vm148, %v133, 0
  %v162 = vsel %vm148, %v136, 0
  %v165 = vsel %vm148, %v139, 0
  %v168 = vsel %vm148, %v142, 0
  %v171 = vsel %vm148, %v145, 0
  %vm173 = vcmask 1041408
  %v175 = vsel %vm173, %v16, 0
  %177 = vmatpush.msra.mxu0 0.0
  %178 = vmatpush.msra.mxu0 0.0
  %179 = vmatpush.msra.mxu0 0.0
  %180 = vmatpush.msra.mxu0 0.0
  %181 = vmatpush.msra.mxu0 0.0
  %182 = vmatpush.msra.mxu0 0.0
  %183 = vmatpush.msra.mxu0 0.0
  %184 = vmatpush.msra.mxu0 0.0
  %185 = vmatpush.msra.mxu0 0.0
  %186 = vmatpush.msra.mxu0 0.0
  %187 = vmatpush.msra.mxu0 0.0
  %188 = vmatpush.msra.mxu0 0.0
  %189 = vmatpush.msra.mxu0 0.0
  %190 = vmatpush.msra.mxu0 0.0
  %191 = vmatpush.msra.mxu0 %v175
  %192 = vmatpush.msra.mxu0 %v15
  %193 = vmatmul.f32.gmra.mxu0 %v150
  %v194 = vpop.f32.mrf.mxu0
  %v195 = vadd.f32 %v147, %v194
  %196 = vmatmul.f32.gmra.mxu0 %v153
  %v197 = vpop.f32.mrf.mxu0
  %v198 = vadd.f32 %v147, %v197
  %199 = vmatmul.f32.gmra.mxu0 %v156
  %v200 = vpop.f32.mrf.mxu0
  %v201 = vadd.f32 %v147, %v200
  %202 = vmatmul.f32.gmra.mxu0 %v159
  %v203 = vpop.f32.mrf.mxu0
  %v204 = vadd.f32 %v147, %v203
  %205 = vmatmul.f32.gmra.mxu0 %v162
  %v206 = vpop.f32.mrf.mxu0
  %v207 = vadd.f32 %v147, %v206
  %208 = vmatmul.f32.gmra.mxu0 %v165
  %v209 = vpop.f32.mrf.mxu0
  %v210 = vadd.f32 %v147, %v209
  %211 = vmatmul.f32.gmra.mxu0 %v168
  %v212 = vpop.f32.mrf.mxu0
  %v213 = vadd.f32 %v147, %v212
  %214 = vmatmul.f32.gmra.mxu0 %v171
  %v215 = vpop.f32.mrf.mxu0
  %v216 = vadd.f32 %v147, %v215
  %217 = vdwg.mxu0
  %v219 = vsel %vm148, 0.0, 0
  %v222 = vsel %vm173, %v18, 0
  %224 = vmatpush.msra.mxu0 0.0
  %225 = vmatpush.msra.mxu0 0.0
  %226 = vmatpush.msra.mxu0 0.0
  %227 = vmatpush.msra.mxu0 0.0
  %228 = vmatpush.msra.mxu0 0.0
  %229 = vmatpush.msra.mxu0 0.0
  %230 = vmatpush.msra.mxu0 0.0
  %231 = vmatpush.msra.mxu0 0.0
  %232 = vmatpush.msra.mxu0 0.0
  %233 = vmatpush.msra.mxu0 0.0
  %234 = vmatpush.msra.mxu0 0.0
  %235 = vmatpush.msra.mxu0 0.0
  %236 = vmatpush.msra.mxu0 0.0
  %237 = vmatpush.msra.mxu0 0.0
  %238 = vmatpush.msra.mxu0 %v222
  %239 = vmatpush.msra.mxu0 %v17
  %240 = vmatmul.f32.gmra.mxu0 %v219
  %v241 = vpop.f32.mrf.mxu0
  %v242 = vadd.f32 0.0, %v241
  %243 = vdwg.mxu0
  %v244 = vadd.f32 %v195, %v242
  %v245 = vxor.u32 %v244, 2147483648
  %v246 = vmul.f32 %v245, 1.442695
  %v247 = vpow.pop %v246
  %v248 = vadd.f32 %v247, 1.0
  %v249 = vrcp.pop %v248
  %v250 = vmul.f32 %v248, %v249
  %v251 = vsub.f32 1.0, %v250
  %v252 = vmul.f32 %v249, %v251
  %v253 = vadd.f32 %v249, %v252
  %vm254 = vweird.f32 %v248
  %vm255 = vweird.f32 %v249
  %vm256 = vmor %vm254, %vm255
  %v257 = vsel %vm256, %v249, %v253
  %v258 = vand.u32 2147483647, %v248
  %vm259 = vcmp.eq.f32.partialorder %v258, 8.507059e+37
  %v260 = vand.u32 %v248, 2147483648
  %v261 = vor.u32 1.1754944e-38, %v260
  %v262 = vsel %vm259, %v261, %v257
  %v263 = vmul.f32 1.0, %v262
  %v264 = vtanh.pop %v244
  %v265 = vmul.f32 %v263, 0.0
  %267 = vrot.lane.b32.xlu0 %v264, 64
  %v268 = vpop.permute.xlu0 %267
  %v270 = vmul.f32 %v263, %v268
  %272 = vrot.lane.b32.xlu0 %v270, 32
  %v273 = vpop.permute.xlu0 %272
  %v275 = vadd.f32 %v265, %v273
  %v276 = vtanh.pop %v275
  %278 = vrot.lane.b32.xlu0 %v276, 64
  %v279 = vpop.permute.xlu0 %278
  %v281 = vmul.f32 %v263, %v279
  %283 = vrot.lane.b32.xlu0 %v281, 32
  %v284 = vpop.permute.xlu0 %283
  %v285 = vsel %vm148, %v284, 0
  %287 = vmatpush.msra.mxu0 0.0
  %288 = vmatpush.msra.mxu0 0.0
  %289 = vmatpush.msra.mxu0 0.0
  %290 = vmatpush.msra.mxu0 0.0
  %291 = vmatpush.msra.mxu0 0.0
  %292 = vmatpush.msra.mxu0 0.0
  %293 = vmatpush.msra.mxu0 0.0
  %294 = vmatpush.msra.mxu0 0.0
  %295 = vmatpush.msra.mxu0 0.0
  %296 = vmatpush.msra.mxu0 0.0
  %297 = vmatpush.msra.mxu0 0.0
  %298 = vmatpush.msra.mxu0 0.0
  %299 = vmatpush.msra.mxu0 0.0
  %300 = vmatpush.msra.mxu0 0.0
  %301 = vmatpush.msra.mxu0 %v222
  %302 = vmatpush.msra.mxu0 %v17
  %303 = vmatmul.f32.gmra.mxu0 %v285
  %v304 = vpop.f32.mrf.mxu0
  %v305 = vadd.f32 0.0, %v304
  %306 = vdwg.mxu0
  %v307 = vadd.f32 %v198, %v305
  %v308 = vxor.u32 %v307, 2147483648
  %v309 = vmul.f32 %v308, 1.442695
  %v310 = vpow.pop %v309
  %v311 = vadd.f32 %v310, 1.0
  %v312 = vrcp.pop %v311
  %v313 = vmul.f32 %v311, %v312
  %v314 = vsub.f32 1.0, %v313
  %v315 = vmul.f32 %v312, %v314
  %v316 = vadd.f32 %v312, %v315
  %vm317 = vweird.f32 %v311
  %vm318 = vweird.f32 %v312
  %vm319 = vmor %vm317, %vm318
  %v320 = vsel %vm319, %v312, %v316
  %v321 = vand.u32 2147483647, %v311
  %vm322 = vcmp.eq.f32.partialorder %v321, 8.507059e+37
  %v323 = vand.u32 %v311, 2147483648
  %v324 = vor.u32 1.1754944e-38, %v323
  %v325 = vsel %vm322, %v324, %v320
  %v326 = vmul.f32 1.0, %v325
  %v327 = vtanh.pop %v307
  %v328 = vmul.f32 %v326, %v275
  %330 = vrot.lane.b32.xlu0 %v327, 64
  %v331 = vpop.permute.xlu0 %330
  %v333 = vmul.f32 %v326, %v331
  %335 = vrot.lane.b32.xlu0 %v333, 32
  %v336 = vpop.permute.xlu0 %335
  %v338 = vadd.f32 %v328, %v336
  %v339 = vtanh.pop %v338
  %341 = vrot.lane.b32.xlu0 %v339, 64
  %v342 = vpop.permute.xlu0 %341
  %v344 = vmul.f32 %v326, %v342
  %346 = vrot.lane.b32.xlu0 %v344, 32
  %v347 = vpop.permute.xlu0 %346
  %v348 = vsel %vm148, %v347, 0
  %350 = vmatpush.msra.mxu0 0.0
  %351 = vmatpush.msra.mxu0 0.0
  %352 = vmatpush.msra.mxu0 0.0
  %353 = vmatpush.msra.mxu0 0.0
  %354 = vmatpush.msra.mxu0 0.0
  %355 = vmatpush.msra.mxu0 0.0
  %356 = vmatpush.msra.mxu0 0.0
  %357 = vmatpush.msra.mxu0 0.0
  %358 = vmatpush.msra.mxu0 0.0
  %359 = vmatpush.msra.mxu0 0.0
  %360 = vmatpush.msra.mxu0 0.0
  %361 = vmatpush.msra.mxu0 0.0
  %362 = vmatpush.msra.mxu0 0.0
  %363 = vmatpush.msra.mxu0 0.0
  %364 = vmatpush.msra.mxu0 %v222
  %365 = vmatpush.msra.mxu0 %v17
  %366 = vmatmul.f32.gmra.mxu0 %v348
  %v367 = vpop.f32.mrf.mxu0
  %v368 = vadd.f32 0.0, %v367
  %369 = vdwg.mxu0
  %v370 = vadd.f32 %v201, %v368
  %v371 = vxor.u32 %v370, 2147483648
  %v372 = vmul.f32 %v371, 1.442695
  %v373 = vpow.pop %v372
  %v374 = vadd.f32 %v373, 1.0
  %v375 = vrcp.pop %v374
  %v376 = vmul.f32 %v374, %v375
  %v377 = vsub.f32 1.0, %v376
  %v378 = vmul.f32 %v375, %v377
  %v379 = vadd.f32 %v375, %v378
  %vm380 = vweird.f32 %v374
  %vm381 = vweird.f32 %v375
  %vm382 = vmor %vm380, %vm381
  %v383 = vsel %vm382, %v375, %v379
  %v384 = vand.u32 2147483647, %v374
  %vm385 = vcmp.eq.f32.partialorder %v384, 8.507059e+37
  %v386 = vand.u32 %v374, 2147483648
  %v387 = vor.u32 1.1754944e-38, %v386
  %v388 = vsel %vm385, %v387, %v383
  %v389 = vmul.f32 1.0, %v388
  %v390 = vtanh.pop %v370
  %v391 = vmul.f32 %v389, %v338
  %393 = vrot.lane.b32.xlu0 %v390, 64
  %v394 = vpop.permute.xlu0 %393
  %v396 = vmul.f32 %v389, %v394
  %398 = vrot.lane.b32.xlu0 %v396, 32
  %v399 = vpop.permute.xlu0 %398
  %v401 = vadd.f32 %v391, %v399
  %v402 = vtanh.pop %v401
  %404 = vrot.lane.b32.xlu0 %v402, 64
  %v405 = vpop.permute.xlu0 %404
  %v407 = vmul.f32 %v389, %v405
  %409 = vrot.lane.b32.xlu0 %v407, 32
  %v410 = vpop.permute.xlu0 %409
  %v411 = vsel %vm148, %v410, 0
  %413 = vmatpush.msra.mxu0 0.0
  %414 = vmatpush.msra.mxu0 0.0
  %415 = vmatpush.msra.mxu0 0.0
  %416 = vmatpush.msra.mxu0 0.0
  %417 = vmatpush.msra.mxu0 0.0
  %418 = vmatpush.msra.mxu0 0.0
  %419 = vmatpush.msra.mxu0 0.0
  %420 = vmatpush.msra.mxu0 0.0
  %421 = vmatpush.msra.mxu0 0.0
  %422 = vmatpush.msra.mxu0 0.0
  %423 = vmatpush.msra.mxu0 0.0
  %424 = vmatpush.msra.mxu0 0.0
  %425 = vmatpush.msra.mxu0 0.0
  %426 = vmatpush.msra.mxu0 0.0
  %427 = vmatpush.msra.mxu0 %v222
  %428 = vmatpush.msra.mxu0 %v17
  %429 = vmatmul.f32.gmra.mxu0 %v411
  %v430 = vpop.f32.mrf.mxu0
  %v431 = vadd.f32 0.0, %v430
  %432 = vdwg.mxu0
  %v433 = vadd.f32 %v204, %v431
  %v434 = vxor.u32 %v433, 2147483648
  %v435 = vmul.f32 %v434, 1.442695
  %v436 = vpow.pop %v435
  %v437 = vadd.f32 %v436, 1.0
  %v438 = vrcp.pop %v437
  %v439 = vmul.f32 %v437, %v438
  %v440 = vsub.f32 1.0, %v439
  %v441 = vmul.f32 %v438, %v440
  %v442 = vadd.f32 %v438, %v441
  %vm443 = vweird.f32 %v437
  %vm444 = vweird.f32 %v438
  %vm445 = vmor %vm443, %vm444
  %v446 = vsel %vm445, %v438, %v442
  %v447 = vand.u32 2147483647, %v437
  %vm448 = vcmp.eq.f32.partialorder %v447, 8.507059e+37
  %v449 = vand.u32 %v437, 2147483648
  %v450 = vor.u32 1.1754944e-38, %v449
  %v451 = vsel %vm448, %v450, %v446
  %v452 = vmul.f32 1.0, %v451
  %v453 = vtanh.pop %v433
  %v454 = vmul.f32 %v452, %v401
  %456 = vrot.lane.b32.xlu0 %v453, 64
  %v457 = vpop.permute.xlu0 %456
  %v459 = vmul.f32 %v452, %v457
  %461 = vrot.lane.b32.xlu0 %v459, 32
  %v462 = vpop.permute.xlu0 %461
  %v464 = vadd.f32 %v454, %v462
  %v465 = vtanh.pop %v464
  %467 = vrot.lane.b32.xlu0 %v465, 64
  %v468 = vpop.permute.xlu0 %467
  %v470 = vmul.f32 %v452, %v468
  %472 = vrot.lane.b32.xlu0 %v470, 32
  %v473 = vpop.permute.xlu0 %472
  %v474 = vsel %vm148, %v473, 0
  %476 = vmatpush.msra.mxu0 0.0
  %477 = vmatpush.msra.mxu0 0.0
  %478 = vmatpush.msra.mxu0 0.0
  %479 = vmatpush.msra.mxu0 0.0
  %480 = vmatpush.msra.mxu0 0.0
  %481 = vmatpush.msra.mxu0 0.0
  %482 = vmatpush.msra.mxu0 0.0
  %483 = vmatpush.msra.mxu0 0.0
  %484 = vmatpush.msra.mxu0 0.0
  %485 = vmatpush.msra.mxu0 0.0
  %486 = vmatpush.msra.mxu0 0.0
  %487 = vmatpush.msra.mxu0 0.0
  %488 = vmatpush.msra.mxu0 0.0
  %489 = vmatpush.msra.mxu0 0.0
  %490 = vmatpush.msra.mxu0 %v222
  %491 = vmatpush.msra.mxu0 %v17
  %492 = vmatmul.f32.gmra.mxu0 %v474
  %v493 = vpop.f32.mrf.mxu0
  %v494 = vadd.f32 0.0, %v493
  %495 = vdwg.mxu0
  %v496 = vadd.f32 %v207, %v494
  %v497 = vxor.u32 %v496, 2147483648
  %v498 = vmul.f32 %v497, 1.442695
  %v499 = vpow.pop %v498
  %v500 = vadd.f32 %v499, 1.0
  %v501 = vrcp.pop %v500
  %v502 = vmul.f32 %v500, %v501
  %v503 = vsub.f32 1.0, %v502
  %v504 = vmul.f32 %v501, %v503
  %v505 = vadd.f32 %v501, %v504
  %vm506 = vweird.f32 %v500
  %vm507 = vweird.f32 %v501
  %vm508 = vmor %vm506, %vm507
  %v509 = vsel %vm508, %v501, %v505
  %v510 = vand.u32 2147483647, %v500
  %vm511 = vcmp.eq.f32.partialorder %v510, 8.507059e+37
  %v512 = vand.u32 %v500, 2147483648
  %v513 = vor.u32 1.1754944e-38, %v512
  %v514 = vsel %vm511, %v513, %v509
  %v515 = vmul.f32 1.0, %v514
  %v516 = vtanh.pop %v496
  %v517 = vmul.f32 %v515, %v464
  %519 = vrot.lane.b32.xlu0 %v516, 64
  %v520 = vpop.permute.xlu0 %519
  %v522 = vmul.f32 %v515, %v520
  %524 = vrot.lane.b32.xlu0 %v522, 32
  %v525 = vpop.permute.xlu0 %524
  %v527 = vadd.f32 %v517, %v525
  %v528 = vtanh.pop %v527
  %530 = vrot.lane.b32.xlu0 %v528, 64
  %v531 = vpop.permute.xlu0 %530
  %v533 = vmul.f32 %v515, %v531
  %535 = vrot.lane.b32.xlu0 %v533, 32
  %v536 = vpop.permute.xlu0 %535
  %v537 = vsel %vm148, %v536, 0
  %539 = vmatpush.msra.mxu0 0.0
  %540 = vmatpush.msra.mxu0 0.0
  %541 = vmatpush.msra.mxu0 0.0
  %542 = vmatpush.msra.mxu0 0.0
  %543 = vmatpush.msra.mxu0 0.0
  %544 = vmatpush.msra.mxu0 0.0
  %545 = vmatpush.msra.mxu0 0.0
  %546 = vmatpush.msra.mxu0 0.0
  %547 = vmatpush.msra.mxu0 0.0
  %548 = vmatpush.msra.mxu0 0.0
  %549 = vmatpush.msra.mxu0 0.0
  %550 = vmatpush.msra.mxu0 0.0
  %551 = vmatpush.msra.mxu0 0.0
  %552 = vmatpush.msra.mxu0 0.0
  %553 = vmatpush.msra.mxu0 %v222
  %554 = vmatpush.msra.mxu0 %v17
  %555 = vmatmul.f32.gmra.mxu0 %v537
  %v556 = vpop.f32.mrf.mxu0
  %v557 = vadd.f32 0.0, %v556
  %558 = vdwg.mxu0
  %v559 = vadd.f32 %v210, %v557
  %v560 = vxor.u32 %v559, 2147483648
  %v561 = vmul.f32 %v560, 1.442695
  %v562 = vpow.pop %v561
  %v563 = vadd.f32 %v562, 1.0
  %v564 = vrcp.pop %v563
  %v565 = vmul.f32 %v563, %v564
  %v566 = vsub.f32 1.0, %v565
  %v567 = vmul.f32 %v564, %v566
  %v568 = vadd.f32 %v564, %v567
  %vm569 = vweird.f32 %v563
  %vm570 = vweird.f32 %v564
  %vm571 = vmor %vm569, %vm570
  %v572 = vsel %vm571, %v564, %v568
  %v573 = vand.u32 2147483647, %v563
  %vm574 = vcmp.eq.f32.partialorder %v573, 8.507059e+37
  %v575 = vand.u32 %v563, 2147483648
  %v576 = vor.u32 1.1754944e-38, %v575
  %v577 = vsel %vm574, %v576, %v572
  %v578 = vmul.f32 1.0, %v577
  %v579 = vtanh.pop %v559
  %v580 = vmul.f32 %v578, %v527
  %582 = vrot.lane.b32.xlu0 %v579, 64
  %v583 = vpop.permute.xlu0 %582
  %v585 = vmul.f32 %v578, %v583
  %587 = vrot.lane.b32.xlu0 %v585, 32
  %v588 = vpop.permute.xlu0 %587
  %v590 = vadd.f32 %v580, %v588
  %v591 = vtanh.pop %v590
  %593 = vrot.lane.b32.xlu0 %v591, 64
  %v594 = vpop.permute.xlu0 %593
  %v596 = vmul.f32 %v578, %v594
  %598 = vrot.lane.b32.xlu0 %v596, 32
  %v599 = vpop.permute.xlu0 %598
  %v600 = vsel %vm148, %v599, 0
  %602 = vmatpush.msra.mxu0 0.0
  %603 = vmatpush.msra.mxu0 0.0
  %604 = vmatpush.msra.mxu0 0.0
  %605 = vmatpush.msra.mxu0 0.0
  %606 = vmatpush.msra.mxu0 0.0
  %607 = vmatpush.msra.mxu0 0.0
  %608 = vmatpush.msra.mxu0 0.0
  %609 = vmatpush.msra.mxu0 0.0
  %610 = vmatpush.msra.mxu0 0.0
  %611 = vmatpush.msra.mxu0 0.0
  %612 = vmatpush.msra.mxu0 0.0
  %613 = vmatpush.msra.mxu0 0.0
  %614 = vmatpush.msra.mxu0 0.0
  %615 = vmatpush.msra.mxu0 0.0
  %616 = vmatpush.msra.mxu0 %v222
  %617 = vmatpush.msra.mxu0 %v17
  %618 = vmatmul.f32.gmra.mxu0 %v600
  %v619 = vpop.f32.mrf.mxu0
  %v620 = vadd.f32 0.0, %v619
  %621 = vdwg.mxu0
  %v622 = vadd.f32 %v213, %v620
  %v623 = vxor.u32 %v622, 2147483648
  %v624 = vmul.f32 %v623, 1.442695
  %v625 = vpow.pop %v624
  %v626 = vadd.f32 %v625, 1.0
  %v627 = vrcp.pop %v626
  %v628 = vmul.f32 %v626, %v627
  %v629 = vsub.f32 1.0, %v628
  %v630 = vmul.f32 %v627, %v629
  %v631 = vadd.f32 %v627, %v630
  %vm632 = vweird.f32 %v626
  %vm633 = vweird.f32 %v627
  %vm634 = vmor %vm632, %vm633
  %v635 = vsel %vm634, %v627, %v631
  %v636 = vand.u32 2147483647, %v626
  %vm637 = vcmp.eq.f32.partialorder %v636, 8.507059e+37
  %v638 = vand.u32 %v626, 2147483648
  %v639 = vor.u32 1.1754944e-38, %v638
  %v640 = vsel %vm637, %v639, %v635
  %v641 = vmul.f32 1.0, %v640
  %v642 = vtanh.pop %v622
  %v643 = vmul.f32 %v641, %v590
  %645 = vrot.lane.b32.xlu0 %v642, 64
  %v646 = vpop.permute.xlu0 %645
  %v648 = vmul.f32 %v641, %v646
  %650 = vrot.lane.b32.xlu0 %v648, 32
  %v651 = vpop.permute.xlu0 %650
  %v653 = vadd.f32 %v643, %v651
  %v654 = vtanh.pop %v653
  %656 = vrot.lane.b32.xlu0 %v654, 64
  %v657 = vpop.permute.xlu0 %656
  %v659 = vmul.f32 %v641, %v657
  %661 = vrot.lane.b32.xlu0 %v659, 32
  %v662 = vpop.permute.xlu0 %661
  %v663 = vsel %vm148, %v662, 0
  %665 = vmatpush.msra.mxu0 0.0
  %666 = vmatpush.msra.mxu0 0.0
  %667 = vmatpush.msra.mxu0 0.0
  %668 = vmatpush.msra.mxu0 0.0
  %669 = vmatpush.msra.mxu0 0.0
  %670 = vmatpush.msra.mxu0 0.0
  %671 = vmatpush.msra.mxu0 0.0
  %672 = vmatpush.msra.mxu0 0.0
  %673 = vmatpush.msra.mxu0 0.0
  %674 = vmatpush.msra.mxu0 0.0
  %675 = vmatpush.msra.mxu0 0.0
  %676 = vmatpush.msra.mxu0 0.0
  %677 = vmatpush.msra.mxu0 0.0
  %678 = vmatpush.msra.mxu0 0.0
  %679 = vmatpush.msra.mxu0 %v222
  %680 = vmatpush.msra.mxu0 %v17
  %681 = vmatmul.f32.gmra.mxu0 %v663
  %v682 = vpop.f32.mrf.mxu0
  %v683 = vadd.f32 0.0, %v682
  %684 = vdwg.mxu0
  %v685 = vadd.f32 %v216, %v683
  %v686 = vxor.u32 %v685, 2147483648
  %v687 = vmul.f32 %v686, 1.442695
  %v688 = vpow.pop %v687
  %v689 = vadd.f32 %v688, 1.0
  %v690 = vrcp.pop %v689
  %v691 = vmul.f32 %v689, %v690
  %v692 = vsub.f32 1.0, %v691
  %v693 = vmul.f32 %v690, %v692
  %v694 = vadd.f32 %v690, %v693
  %vm695 = vweird.f32 %v689
  %vm696 = vweird.f32 %v690
  %vm697 = vmor %vm695, %vm696
  %v698 = vsel %vm697, %v690, %v694
  %v699 = vand.u32 2147483647, %v689
  %vm700 = vcmp.eq.f32.partialorder %v699, 8.507059e+37
  %v701 = vand.u32 %v689, 2147483648
  %v702 = vor.u32 1.1754944e-38, %v701
  %v703 = vsel %vm700, %v702, %v698
  %v704 = vmul.f32 1.0, %v703
  %v705 = vtanh.pop %v685
  %v706 = vmul.f32 %v704, %v653
  %708 = vrot.lane.b32.xlu0 %v705, 64
  %v709 = vpop.permute.xlu0 %708
  %v711 = vmul.f32 %v704, %v709
  %713 = vrot.lane.b32.xlu0 %v711, 32
  %v714 = vpop.permute.xlu0 %713
  %v716 = vadd.f32 %v706, %v714
  %v717 = vtanh.pop %v716
  %719 = vrot.lane.b32.xlu0 %v717, 64
  %v720 = vpop.permute.xlu0 %719
  %v722 = vmul.f32 %v704, %v720
  %v723 = vperm.slane %v22, 0
  %725 = vrot.lane.b32.xlu0 %v722, 32
  %v726 = vpop.permute.xlu0 %725
  %v727 = vsel %vm148, %v726, 0
  %v730 = vsel %vm173, %v21, 0
  %732 = vmatpush.msra.mxu0 0.0
  %733 = vmatpush.msra.mxu0 0.0
  %734 = vmatpush.msra.mxu0 0.0
  %735 = vmatpush.msra.mxu0 0.0
  %736 = vmatpush.msra.mxu0 0.0
  %737 = vmatpush.msra.mxu0 0.0
  %738 = vmatpush.msra.mxu0 0.0
  %739 = vmatpush.msra.mxu0 0.0
  %740 = vmatpush.msra.mxu0 0.0
  %741 = vmatpush.msra.mxu0 0.0
  %742 = vmatpush.msra.mxu0 0.0
  %743 = vmatpush.msra.mxu0 0.0
  %744 = vmatpush.msra.mxu0 0.0
  %745 = vmatpush.msra.mxu0 0.0
  %746 = vmatpush.msra.mxu0 %v730
  %747 = vmatpush.msra.mxu0 %v20
  %748 = vmatmul.f32.gmra.mxu0 %v285
  %v749 = vpop.f32.mrf.mxu0
  %v750 = vadd.f32 %v723, %v749
  %751 = vmatmul.f32.gmra.mxu0 %v348
  %v752 = vpop.f32.mrf.mxu0
  %v753 = vadd.f32 %v723, %v752
  %754 = vmatmul.f32.gmra.mxu0 %v411
  %v755 = vpop.f32.mrf.mxu0
  %v756 = vadd.f32 %v723, %v755
  %757 = vmatmul.f32.gmra.mxu0 %v474
  %v758 = vpop.f32.mrf.mxu0
  %v759 = vadd.f32 %v723, %v758
  %760 = vmatmul.f32.gmra.mxu0 %v537
  %v761 = vpop.f32.mrf.mxu0
  %v762 = vadd.f32 %v723, %v761
  %763 = vmatmul.f32.gmra.mxu0 %v600
  %v764 = vpop.f32.mrf.mxu0
  %v765 = vadd.f32 %v723, %v764
  %766 = vmatmul.f32.gmra.mxu0 %v663
  %v767 = vpop.f32.mrf.mxu0
  %v768 = vadd.f32 %v723, %v767
  %769 = vmatmul.f32.gmra.mxu0 %v727
  %v770 = vpop.f32.mrf.mxu0
  %v771 = vadd.f32 %v723, %v770
  %772 = vdwg.mxu0
  %v773 = vmax.f32 %v750, %v753
  %v774 = vmax.f32 %v773, %v756
  %v775 = vmax.f32 %v774, %v759
  %v776 = vmax.f32 %v775, %v762
  %v777 = vmax.f32 %v776, %v765
  %v778 = vmax.f32 %v777, %v768
  %v779 = vmax.f32 %v778, %v771
  %v780 = vsub.f32 %v750, %v779
  %v781 = vmul.f32 %v780, 1.442695
  %v782 = vpow.pop %v781
  %v783 = vsub.f32 %v753, %v779
  %v784 = vmul.f32 %v783, 1.442695
  %v785 = vpow.pop %v784
  %v786 = vsub.f32 %v756, %v779
  %v787 = vmul.f32 %v786, 1.442695
  %v788 = vpow.pop %v787
  %v789 = vsub.f32 %v759, %v779
  %v790 = vmul.f32 %v789, 1.442695
  %v791 = vpow.pop %v790
  %v792 = vsub.f32 %v762, %v779
  %v793 = vmul.f32 %v792, 1.442695
  %v794 = vpow.pop %v793
  %v795 = vsub.f32 %v765, %v779
  %v796 = vmul.f32 %v795, 1.442695
  %v797 = vpow.pop %v796
  %v798 = vsub.f32 %v768, %v779
  %v799 = vmul.f32 %v798, 1.442695
  %v800 = vpow.pop %v799
  %v801 = vsub.f32 %v771, %v779
  %v802 = vmul.f32 %v801, 1.442695
  %v803 = vpow.pop %v802
  %v804 = vadd.f32 %v782, %v785
  %v805 = vadd.f32 %v804, %v788
  %v806 = vadd.f32 %v805, %v791
  %v807 = vadd.f32 %v806, %v794
  %v808 = vadd.f32 %v807, %v797
  %v809 = vadd.f32 %v808, %v800
  %v810 = vadd.f32 %v809, %v803
  %v811 = vrcp.pop %v810
  %v812 = vmul.f32 %v810, %v811
  %v813 = vsub.f32 1.0, %v812
  %v814 = vmul.f32 %v811, %v813
  %v815 = vadd.f32 %v811, %v814
  %vm816 = vweird.f32 %v810
  %vm817 = vweird.f32 %v811
  %vm818 = vmor %vm816, %vm817
  %v819 = vsel %vm818, %v811, %v815
  %v820 = vand.u32 2147483647, %v810
  %vm821 = vcmp.eq.f32.partialorder %v820, 8.507059e+37
  %v822 = vand.u32 %v810, 2147483648
  %v823 = vor.u32 1.1754944e-38, %v822
  %v824 = vsel %vm821, %v823, %v819
  %v825 = vmul.f32 1.0, %v824
  %v826 = vmul.f32 %v782, %v825
  %v827 = vmul.f32 %v785, %v825
  %v828 = vmul.f32 %v788, %v825
  %v829 = vmul.f32 %v791, %v825
  %v830 = vmul.f32 %v794, %v825
  %v831 = vmul.f32 %v797, %v825
  %v832 = vmul.f32 %v800, %v825
  %v833 = vmul.f32 %v803, %v825
  %834 = vst [vmem:[%s2] sm:$0xff] %v826
  %835 = vst [vmem:[%s2 + $0x8] sm:$0xff] %v827
  %836 = vst [vmem:[%s2 + $0x10] sm:$0xff] %v828
  %837 = vst [vmem:[%s2 + $0x18] sm:$0xff] %v829
  %838 = vst [vmem:[%s2 + $0x20] sm:$0xff] %v830
  %839 = vst [vmem:[%s2 + $0x28] sm:$0xff] %v831
  %840 = vst [vmem:[%s2 + $0x30] sm:$0xff] %v832
  %841 = vst [vmem:[%s2 + $0x38] sm:$0xff] %v833
  // Predicated region
  $region10: #{forward_batched.1} parent=0 // pred_check
    _
  $region11: #{forward_batched.1} parent=0 // pred_check_branch
    %843 = sbr.rel (0) target = $region13
  $region12: #{forward_batched.1} parent=0 // pred_region
    _
  $region13: #{forward_batched.1} parent=0 // pred_fallthru
    _
  // Predicated region
  $region14: #{forward_batched.1} parent=0 // pred_check
    _
  $region15: #{forward_batched.1} parent=0 // pred_check_branch
    %845 = sbr.rel (0) target = $region17
  $region16: #{forward_batched.1} parent=0 // pred_region
    _
  $region17: #{forward_batched.1} parent=0 // pred_fallthru
    _

</llo_original>
